<compile_context>
chip_gen: v7x
topology: tpu7x:2x2x1
jax: 0.10.0
libtpu: 0.0.40
codegen_flags: <defaults>
</compile_context>

<pallas_src>
import jax
import jax.numpy as jnp
import numpy as np
from jax.experimental import pallas as pl
from jax.experimental.pallas import tpu as pltpu

EPS = 1e-6


def _round_up(x, m):
    return ((x + m - 1) // m) * m


def ndrm2_kernel(params_ref, qd_ref, w_ref, dlen_ref, out_ref):
    # params (SMEM): [running_mean_dlen, running_mean_tf, fc_w, fc_b]
    rm_dlen = params_ref[0]
    rm_tf = params_ref[1]
    fc_w = params_ref[2]
    fc_b = params_ref[3]

    # Hoisted scalar reciprocals for the two BatchScale denominators.
    inv_rm_dlen = 1.0 / (rm_dlen + EPS)
    inv_rm_tf = 1.0 / (rm_tf + EPS)

    # dlen branch: BatchScale(1) -> Linear(1,1) -> ReLU.   (1, TND), lane-dense.
    d = jnp.maximum(dlen_ref[...] * inv_rm_dlen * fc_w + fc_b, 0.0)

    # tf branch: BatchScale(1) on qd, saturating ratio.    (Nq, TND)
    y = qd_ref[...] * inv_rm_tf
    y = y * pl.reciprocal(y + d + EPS, approx=False)   # d broadcasts over sublanes

    # Fused idf*mask weighting, (Nq, 1) broadcast across lanes.
    y = y * w_ref[...]

    # Sum over query terms = sublane axis -> single lane-dense (1, TND) store.
    out_ref[...] = jnp.sum(y, axis=0, keepdims=True)


def ndrm2_forward(qd, mask_q, q_idf, dlen, params, *, tnd=512):
    """qd: (B, Nd, Nq); mask_q, q_idf: (B, Nq); dlen: (B, Nd); params: (4,).

    Returns (B, Nd) scores (qti_mode=False path).
    """
    B, Nd, Nq = qd.shape

    # Lane-dense layout: put Nd on the last (lane) axis; fuse idf * mask.
    qd_t = jnp.transpose(qd.astype(jnp.float32), (0, 2, 1))          # (B, Nq, Nd)
    dlen3 = dlen.astype(jnp.float32).reshape(B, 1, Nd)                # (B, 1, Nd)
    w3 = (q_idf.astype(jnp.float32) *
          mask_q.astype(jnp.float32)).reshape(B, Nq, 1)               # (B, Nq, 1)

    # Tile Nd in multiples of 128 lanes; pad Nd up to a tile multiple.
    tnd = min(tnd, _round_up(Nd, 128))
    nd_pad = _round_up(Nd, tnd)
    if nd_pad != Nd:
        pad = nd_pad - Nd
        qd_t = jnp.pad(qd_t, ((0, 0), (0, 0), (0, pad)))
        dlen3 = jnp.pad(dlen3, ((0, 0), (0, 0), (0, pad)))
    n_tiles = nd_pad // tnd

    out = pl.pallas_call(
        ndrm2_kernel,
        out_shape=jax.ShapeDtypeStruct((B, 1, nd_pad), jnp.float32),
        grid=(B, n_tiles),
        in_specs=[
            pl.BlockSpec(memory_space=pltpu.MemorySpace.SMEM),         # params
            pl.BlockSpec((None, Nq, tnd), lambda b, t: (b, 0, t)),     # qd (lane-dense)
            pl.BlockSpec((None, Nq, 1), lambda b, t: (b, 0, 0)),       # idf*mask
            pl.BlockSpec((None, 1, tnd), lambda b, t: (b, 0, t)),      # dlen (lane-dense)
        ],
        out_specs=pl.BlockSpec((None, 1, tnd), lambda b, t: (b, 0, t)),
        compiler_params=pltpu.CompilerParams(
            dimension_semantics=("parallel", "parallel")),
    )(params, qd_t, w3, dlen3)

    return out.reshape(B, nd_pad)[:, :Nd]


def ndrm2_ref(qd, mask_q, q_idf, dlen, params):
    """Pure-JAX reference mirroring the PyTorch forward (eval mode)."""
    rm_dlen, rm_tf, fc_w, fc_b = [params[i] for i in range(4)]
    d = dlen / (rm_dlen + EPS)                       # BatchScale(1) eval
    d = jnp.maximum(d * fc_w + fc_b, 0.0)            # Linear(1,1)+ReLU
    d = d[..., None]                                 # (B, Nd, 1)
    y = qd / (rm_tf + EPS)                           # BatchScale(1) eval
    y = y / (y + d + EPS)
    y = y * q_idf[:, None, :]
    y = y * mask_q[:, None, :]
    return y.sum(axis=-1)


if __name__ == "__main__":
    key = jax.random.PRNGKey(0)
    k1, k2, k3, k4, j1, j2, j3, j4 = jax.random.split(key, 8)

    # --- small-shape check, module-default params (running_mean = 0) ---
    B, Nd, Nq = 2, 16, 8   # batch, candidate docs, query terms
    qd = jax.random.uniform(k1, (B, Nd, Nq), jnp.float32, 0.0, 5.0)     # term freqs
    dlen = jax.random.uniform(k2, (B, Nd), jnp.float32, 50.0, 200.0)    # doc lengths
    q_idf = jax.random.uniform(k3, (B, Nq), jnp.float32, 0.0, 10.0)     # query idf
    mask_q = (jax.random.uniform(k4, (B, Nq)) > 0.3).astype(jnp.float32)
    # Module __init__: BatchScale.running_mean = 0 (both), fc weight = 1, bias = 0.
    params = jnp.array([0.0, 0.0, 1.0, 0.0], dtype=jnp.float32)

    out = jax.block_until_ready(ndrm2_forward(qd, mask_q, q_idf, dlen, params))
    ref = ndrm2_ref(qd, mask_q, q_idf, dlen, params)
    np.testing.assert_allclose(np.asarray(out), np.asarray(ref),
                               rtol=1e-5, atol=1e-5)

    # --- tiled check: multiple Nd tiles + lane padding + nonzero running means ---
    B2, Nd2, Nq2 = 2, 1280, 24    # nd_pad = 1536 -> 3 tiles of 512 lanes
    qd2 = jax.random.uniform(j1, (B2, Nd2, Nq2), jnp.float32, 0.0, 5.0)
    dlen2 = jax.random.uniform(j2, (B2, Nd2), jnp.float32, 50.0, 400.0)
    q_idf2 = jax.random.uniform(j3, (B2, Nq2), jnp.float32, 0.0, 10.0)
    mask_q2 = (jax.random.uniform(j4, (B2, Nq2)) > 0.3).astype(jnp.float32)
    params2 = jnp.array([187.5, 1.4, 0.8, 0.05], dtype=jnp.float32)

    out2 = jax.block_until_ready(
        ndrm2_forward(qd2, mask_q2, q_idf2, dlen2, params2))
    ref2 = ndrm2_ref(qd2, mask_q2, q_idf2, dlen2, params2)
    np.testing.assert_allclose(np.asarray(out2), np.asarray(ref2),
                               rtol=1e-5, atol=1e-5)

    print("KERNEL_OK")
</pallas_src>

<mosaic_0001>
module attributes {stable_mosaic.version = 11 : i64} {
  func.func @ndrm2_kernel(%arg0: i32, %arg1: i32, %arg2: memref<4xf32, #tpu.memory_space<smem>>, %arg3: memref<1x8x128xf32, #tpu.memory_space<vmem>>, %arg4: memref<1x8x1xf32, #tpu.memory_space<vmem>>, %arg5: memref<1x1x128xf32, #tpu.memory_space<vmem>>, %arg6: memref<1x1x128xf32, #tpu.memory_space<vmem>>) attributes {dimension_semantics = [#tpu.dimension_semantics<parallel>, #tpu.dimension_semantics<parallel>], iteration_bounds = array<i64: 2, 1>, scalar_prefetch = 0 : i64, scratch_operands = 0 : i64, tpu.core_type = #tpu.core_type<tc>, window_params = [{transform_indices = @transform_0, window_bounds = array<i64: 4>}, {transform_indices = @transform_1, window_bounds = array<i64: 1, 8, 128>}, {transform_indices = @transform_2, window_bounds = array<i64: 1, 8, 1>}, {transform_indices = @transform_3, window_bounds = array<i64: 1, 1, 128>}, {transform_indices = @transform_4, window_bounds = array<i64: 1, 1, 128>}]} {
    %c0 = arith.constant 0 : index
    %0 = memref.load %arg2[%c0] : memref<4xf32, #tpu.memory_space<smem>>
    %c1 = arith.constant 1 : index
    %1 = memref.load %arg2[%c1] : memref<4xf32, #tpu.memory_space<smem>>
    %c2 = arith.constant 2 : index
    %2 = memref.load %arg2[%c2] : memref<4xf32, #tpu.memory_space<smem>>
    %c3 = arith.constant 3 : index
    %3 = memref.load %arg2[%c3] : memref<4xf32, #tpu.memory_space<smem>>
    %cst = arith.constant 9.99999997E-7 : f32
    %4 = arith.addf %0, %cst : f32
    %cst_0 = arith.constant 1.000000e+00 : f32
    %5 = arith.divf %cst_0, %4 : f32
    %cst_1 = arith.constant 9.99999997E-7 : f32
    %6 = arith.addf %1, %cst_1 : f32
    %cst_2 = arith.constant 1.000000e+00 : f32
    %7 = arith.divf %cst_2, %6 : f32
    %c0_3 = arith.constant 0 : index
    %c0_4 = arith.constant 0 : index
    %c0_5 = arith.constant 0 : index
    %8 = vector.load %arg5[%c0_3, %c0_4, %c0_5] : memref<1x1x128xf32, #tpu.memory_space<vmem>>, vector<1x1x128xf32>
    %9 = vector.shape_cast %8 : vector<1x1x128xf32> to vector<1x128xf32>
    %10 = vector.broadcast %5 : f32 to vector<1x128xf32>
    %11 = arith.mulf %9, %10 : vector<1x128xf32>
    %12 = vector.broadcast %2 : f32 to vector<1x128xf32>
    %13 = arith.mulf %11, %12 : vector<1x128xf32>
    %14 = vector.broadcast %3 : f32 to vector<1x128xf32>
    %15 = arith.addf %13, %14 : vector<1x128xf32>
    %cst_6 = arith.constant 0.000000e+00 : f32
    %16 = vector.broadcast %cst_6 : f32 to vector<1x128xf32>
    %17 = arith.maximumf %15, %16 : vector<1x128xf32>
    %c0_7 = arith.constant 0 : index
    %c0_8 = arith.constant 0 : index
    %c0_9 = arith.constant 0 : index
    %18 = vector.load %arg3[%c0_7, %c0_8, %c0_9] : memref<1x8x128xf32, #tpu.memory_space<vmem>>, vector<1x8x128xf32>
    %19 = vector.shape_cast %18 : vector<1x8x128xf32> to vector<8x128xf32>
    %20 = vector.broadcast %7 : f32 to vector<8x128xf32>
    %21 = arith.mulf %19, %20 : vector<8x128xf32>
    %22 = vector.broadcast %17 : vector<1x128xf32> to vector<8x128xf32>
    %23 = arith.addf %21, %22 : vector<8x128xf32>
    %cst_10 = arith.constant 9.99999997E-7 : f32
    %24 = vector.broadcast %cst_10 : f32 to vector<8x128xf32>
    %25 = arith.addf %23, %24 : vector<8x128xf32>
    %26 = tpu.reciprocal %25 : vector<8x128xf32> -> vector<8x128xf32>
    %27 = arith.mulf %21, %26 : vector<8x128xf32>
    %c0_11 = arith.constant 0 : index
    %c0_12 = arith.constant 0 : index
    %c0_13 = arith.constant 0 : index
    %28 = vector.load %arg4[%c0_11, %c0_12, %c0_13] : memref<1x8x1xf32, #tpu.memory_space<vmem>>, vector<1x8x1xf32>
    %29 = vector.shape_cast %28 : vector<1x8x1xf32> to vector<8x1xf32>
    %30 = vector.broadcast %29 : vector<8x1xf32> to vector<8x128xf32>
    %31 = arith.mulf %27, %30 : vector<8x128xf32>
    %cst_14 = arith.constant dense<0.000000e+00> : vector<128xf32>
    %32 = vector.multi_reduction <add>, %31, %cst_14 [0] : vector<8x128xf32> to vector<128xf32>
    %33 = vector.shape_cast %32 : vector<128xf32> to vector<1x128xf32>
    %c0_15 = arith.constant 0 : index
    %c0_16 = arith.constant 0 : index
    %c0_17 = arith.constant 0 : index
    %34 = vector.load %arg6[%c0_15, %c0_16, %c0_17] : memref<1x1x128xf32, #tpu.memory_space<vmem>>, vector<1x1x128xf32>
    %35 = vector.shape_cast %34 : vector<1x1x128xf32> to vector<1x128xf32>
    %36 = vector.shape_cast %33 : vector<1x128xf32> to vector<1x1x128xf32>
    tpu.vector_store %arg6[%c0_15, %c0_16, %c0_17], %36 {strides = array<i32>} : memref<1x1x128xf32, #tpu.memory_space<vmem>>, vector<1x1x128xf32>,
    return
  }
  func.func @transform_0(%arg0: i32, %arg1: i32) -> i32 {
    %c0_i32 = arith.constant 0 : i32
    %c0_i32_0 = arith.constant 0 : i32
    return %c0_i32 : i32
  }
  func.func @transform_1(%arg0: i32, %arg1: i32) -> (i32, i32, i32) {
    %c0_i32 = arith.constant 0 : i32
    %c0_i32_0 = arith.constant 0 : i32
    return %arg0, %c0_i32, %arg1 : i32, i32, i32
  }
  func.func @transform_2(%arg0: i32, %arg1: i32) -> (i32, i32, i32) {
    %c0_i32 = arith.constant 0 : i32
    %c0_i32_0 = arith.constant 0 : i32
    %c0_i32_1 = arith.constant 0 : i32
    return %arg0, %c0_i32, %c0_i32_0 : i32, i32, i32
  }
  func.func @transform_3(%arg0: i32, %arg1: i32) -> (i32, i32, i32) {
    %c0_i32 = arith.constant 0 : i32
    %c0_i32_0 = arith.constant 0 : i32
    return %arg0, %c0_i32, %arg1 : i32, i32, i32
  }
  func.func @transform_4(%arg0: i32, %arg1: i32) -> (i32, i32, i32) {
    %c0_i32 = arith.constant 0 : i32
    %c0_i32_0 = arith.constant 0 : i32
    return %arg0, %c0_i32, %arg1 : i32, i32, i32
  }
}

</mosaic_0001>

<llo_original>
// kernel: tpu_custom_call.1
$region0: #{tpu_custom_call.1}
  #allocation0 [shape = 'u32[]', space=smem, size = 0x4, offset = 0x4, fixed_abs, tag = 'smem constant byte address 0x4 - core index']
  #allocation1 [shape = 'u32[144,128]{1,0:T(1,128)}', space=vmem, size = 0x12000, scoped, tag = 'internal scratch']
  %s0 = inlined_call_operand.vmem [shape: f32[4], index: 0, kind: input, shape index: {}]
  %s1 = inlined_call_operand.vmem [shape: f32[2,8,128], index: 1, kind: input, shape index: {}]
  %s2 = inlined_call_operand.vmem [shape: f32[2,8,1], index: 2, kind: input, shape index: {}]
  %s3 = inlined_call_operand.vmem [shape: f32[2,1,128], index: 3, kind: input, shape index: {}]
  %s4 = inlined_call_operand.hbm [shape: f32[2,1,128], index: 4, kind: output, shape index: {}]
  %s5 = sld [smem:[#allocation0]]
  $region53: #{tpu_custom_call.1} parent=0
    _
  %s7 = ssub.s32 1, %s5
  %s8 = scalar_select 0, %s7, %s5
  $region1: #{tpu_custom_call.1} parent=0
    #allocation2 [shape = 'u8[512]{0}', space=smem, size = 0x200, scoped, tag = 'input window, operand 0, single buffered']
    #allocation3 [shape = 's32[2]{0}', space=sflag, size = 0x8, scoped, tag = 'scoped memory for tpu_custom_call.1']
    #allocation4 [shape = 's32[2]{0}', space=sflag, size = 0x8, scoped, tag = 'scoped memory for tpu_custom_call.1']
    #allocation5 [shape = 'u8[1024]{0}', space=vmem, size = 0x400, scoped, tag = 'output window, operand 0']
    %9 = vsyncpa [#allocation4], 0
    %10 = vsyncpa [#allocation3], 0
    %s11 = scalar_lea.sflag [#allocation3], 1
    %12 = vsyncpa %s11, 0
    loop: start=0, step=1, limit=4
    $region2: #{tpu_custom_call.1} parent=1 // loop_pre_header
      _
    $region3: #{tpu_custom_call.1} parent=1 // loop_header
      %s14 = sphi 0, %s18
      %p15 = scmp.ge.s32.totalorder %s14, 4
      %s21 = sphi 0, %s33
      %s22 = sphi 0, %s29
      %s23 = sphi 0, %s21
      %s24 = sphi 0, %s22
      %s25 = sphi 0, %s23
      %s26 = sphi 0, %s24
      %s34 = sphi 0, %s34
      %s36 = sphi 0, %s34
      %s37 = sphi 0, %s36
      %s51 = sphi 0, %s37
      %s59 = sphi 0, %s61
      %s62 = sphi 0, %s59
      %s63 = sphi 0, %s62
      %s79 = sphi 0, %s63
      %s85 = sphi 0, %s87
      %s88 = sphi 0, %s85
      %s89 = sphi 0, %s88
      %s105 = sphi 0, %s89
      %s113 = sphi 0, %s115
      %s116 = sphi 0, %s113
      %s117 = sphi 0, %s116
      %s133 = sphi 0, %s117
      %s141 = sphi 0, %s143
      %s144 = sphi 0, %s141
      %s145 = sphi 0, %s144
      %s161 = sphi 0, %s145
    $region4: #{tpu_custom_call.1} parent=1 // loop_header_branch
      %17 = sbr.rel (%p15) target = $region8
    $region5: #{tpu_custom_call.1} parent=1 // loop_body
      %s19 = ssub.s32 %s14, 1
      %s20 = ssub.s32 %s14, 2
      %s27 = sadd.s32 1, %s22
      %p28 = scmp.ge.s32.totalorder %s27, 1
      %s29 = scalar_select %p28, 0, %s27
      %s30 = sadd.s32 1, %s21
      %s31 = scalar_select %p28, %s30, %s21
      %p32 = scmp.ge.s32.totalorder %s31, 2
      %s33 = scalar_select %p32, 0, %s31
      %s35 = sadd.s32 %s34, 1
      %p38 = scmp.eq.s32.totalorder %s14, 1
      %p39 = scmp.ne.s32.totalorder %s34, %s36
      %p40 = scmp.eq.s32.totalorder %s14, 0
      %p41 = por %p39, %p40
      %p42 = scmp.ne.s32.totalorder %s34, %s36
      %p43 = scmp.eq.s32.totalorder %s19, 1
      %p44 = por %p42, %p43
      %p45 = scmp.ne.s32.totalorder %s36, %s37
      %p46 = scmp.eq.s32.totalorder %s19, 0
      %p47 = por %p45, %p46
      %p48 = scmp.ne.s32.totalorder %s36, %s37
      %p49 = scmp.eq.s32.totalorder %s20, 1
      %p50 = por %p48, %p49
      %p52 = scmp.ne.s32.totalorder %s37, %s51
      %p53 = scmp.eq.s32.totalorder %s20, 0
      %p54 = por %p52, %p53
      %s55 = ssub.s32 %s21, %s33
      %s56 = ssub.s32 %s22, %s29
      %s57 = sor.u32 %s55, %s56
      %p58 = scmp.eq.s32.totalorder %s57, 0
      %s60 = sadd.s32 %s59, 1
      %s61 = scalar_select %p58, %s59, %s60
      %p64 = pneg %p58
      %p65 = scmp.eq.s32.totalorder %s14, 1
      %p66 = por %p64, %p65
      %p67 = scmp.ne.s32.totalorder %s59, %s62
      %p68 = scmp.eq.s32.totalorder %s14, 0
      %p69 = por %p67, %p68
      %p70 = scmp.ne.s32.totalorder %s59, %s62
      %p71 = scmp.eq.s32.totalorder %s19, 1
      %p72 = por %p70, %p71
      %p73 = scmp.ne.s32.totalorder %s62, %s63
      %p74 = scmp.eq.s32.totalorder %s19, 0
      %p75 = por %p73, %p74
      %p76 = scmp.ne.s32.totalorder %s62, %s63
      %p77 = scmp.eq.s32.totalorder %s20, 1
      %p78 = por %p76, %p77
      %p80 = scmp.ne.s32.totalorder %s63, %s79
      %p81 = scmp.eq.s32.totalorder %s20, 0
      %p82 = por %p80, %p81
      %s83 = ssub.s32 %s21, %s33
      %p84 = scmp.eq.s32.totalorder %s83, 0
      %s86 = sadd.s32 %s85, 1
      %s87 = scalar_select %p84, %s85, %s86
      %p90 = pneg %p84
      %p91 = scmp.eq.s32.totalorder %s14, 1
      %p92 = por %p90, %p91
      %p93 = scmp.ne.s32.totalorder %s85, %s88
      %p94 = scmp.eq.s32.totalorder %s14, 0
      %p95 = por %p93, %p94
      %p96 = scmp.ne.s32.totalorder %s85, %s88
      %p97 = scmp.eq.s32.totalorder %s19, 1
      %p98 = por %p96, %p97
      %p99 = scmp.ne.s32.totalorder %s88, %s89
      %p100 = scmp.eq.s32.totalorder %s19, 0
      %p101 = por %p99, %p100
      %p102 = scmp.ne.s32.totalorder %s88, %s89
      %p103 = scmp.eq.s32.totalorder %s20, 1
      %p104 = por %p102, %p103
      %p106 = scmp.ne.s32.totalorder %s89, %s105
      %p107 = scmp.eq.s32.totalorder %s20, 0
      %p108 = por %p106, %p107
      %s109 = ssub.s32 %s21, %s33
      %s110 = ssub.s32 %s22, %s29
      %s111 = sor.u32 %s109, %s110
      %p112 = scmp.eq.s32.totalorder %s111, 0
      %s114 = sadd.s32 %s113, 1
      %s115 = scalar_select %p112, %s113, %s114
      %p118 = pneg %p112
      %p119 = scmp.eq.s32.totalorder %s14, 1
      %p120 = por %p118, %p119
      %p121 = scmp.ne.s32.totalorder %s113, %s116
      %p122 = scmp.eq.s32.totalorder %s14, 0
      %p123 = por %p121, %p122
      %p124 = scmp.ne.s32.totalorder %s113, %s116
      %p125 = scmp.eq.s32.totalorder %s19, 1
      %p126 = por %p124, %p125
      %p127 = scmp.ne.s32.totalorder %s116, %s117
      %p128 = scmp.eq.s32.totalorder %s19, 0
      %p129 = por %p127, %p128
      %p130 = scmp.ne.s32.totalorder %s116, %s117
      %p131 = scmp.eq.s32.totalorder %s20, 1
      %p132 = por %p130, %p131
      %p134 = scmp.ne.s32.totalorder %s117, %s133
      %p135 = scmp.eq.s32.totalorder %s20, 0
      %p136 = por %p134, %p135
      %s137 = ssub.s32 %s21, %s33
      %s138 = ssub.s32 %s22, %s29
      %s139 = sor.u32 %s137, %s138
      %p140 = scmp.eq.s32.totalorder %s139, 0
      %s142 = sadd.s32 %s141, 1
      %s143 = scalar_select %p140, %s141, %s142
      %p146 = pneg %p140
      %p147 = scmp.eq.s32.totalorder %s14, 1
      %p148 = por %p146, %p147
      %p149 = scmp.ne.s32.totalorder %s141, %s144
      %p150 = scmp.eq.s32.totalorder %s14, 0
      %p151 = por %p149, %p150
      %p152 = scmp.ne.s32.totalorder %s141, %s144
      %p153 = scmp.eq.s32.totalorder %s19, 1
      %p154 = por %p152, %p153
      %p155 = scmp.ne.s32.totalorder %s144, %s145
      %p156 = scmp.eq.s32.totalorder %s19, 0
      %p157 = por %p155, %p156
      %p158 = scmp.ne.s32.totalorder %s144, %s145
      %p159 = scmp.eq.s32.totalorder %s20, 1
      %p160 = por %p158, %p159
      %p162 = scmp.ne.s32.totalorder %s145, %s161
      %p163 = scmp.eq.s32.totalorder %s20, 0
      %p164 = por %p162, %p163
      %p165 = scmp.le.s32.totalorder 1, %s14
      %p166 = scmp.lt.s32.totalorder %s14, 3
      %p167 = pnand %p165, %p166
      %p168 = pneg %p167
      // Predicated region
      $region9: #{tpu_custom_call.1} parent=5 // pred_check
        _
      $region10: #{tpu_custom_call.1} parent=5 // pred_check_branch
        %170 = sbr.rel (%p167) target = $region12
      $region11: #{tpu_custom_call.1} parent=5 // pred_region
        %s171 = ssub.s32 %s14, 1
        // Predicated region
        $region13: #{tpu_custom_call.1} parent=11 // pred_check
          %p172 = pneg %p47
        $region14: #{tpu_custom_call.1} parent=11 // pred_check_branch
          %174 = sbr.rel (%p172) target = $region16
        $region15: #{tpu_custom_call.1} parent=11 // pred_region
          %s176 = ssub.s32 16, 16
          %177 = vsyncadd [#allocation4], %s176
          %s179 = sshll.u32 %s0, 4
          %s180 = int_to_ptr.vmem [resolvable:$true] %s179
          %182 = dma.vmem_to_smem %s180, 16, [#allocation2], [#allocation4]
        $region16: #{tpu_custom_call.1} parent=11 // pred_fallthru
          _
      $region12: #{tpu_custom_call.1} parent=5 // pred_fallthru
        _
      %p183 = scmp.lt.s32.totalorder %s14, 2
      // Predicated region
      $region17: #{tpu_custom_call.1} parent=5 // pred_check
        %p184 = pneg %p183
      $region18: #{tpu_custom_call.1} parent=5 // pred_check_branch
        %186 = sbr.rel (%p184) target = $region20
      $region19: #{tpu_custom_call.1} parent=5 // pred_region
        // Predicated region
        $region21: #{tpu_custom_call.1} parent=19 // pred_check
          %p187 = pneg %p69
        $region22: #{tpu_custom_call.1} parent=19 // pred_check_branch
          %189 = sbr.rel (%p187) target = $region24
        $region23: #{tpu_custom_call.1} parent=19 // pred_region
          %p190 = scmp.lt.s32.totalorder %s21, 1
          %s191 = scalar_select %p190, %s21, 1
          %p192 = scmp.lt.s32.totalorder %s22, 0
          %s193 = scalar_select %p192, %s22, 0
          %s194 = sadd.s32 %s193, %s191
          %s195 = smul.addr %s194, 8
          %s196 = scalar_lea.vmem %s1, %s195
        $region24: #{tpu_custom_call.1} parent=19 // pred_fallthru
          _
        // Predicated region
        $region25: #{tpu_custom_call.1} parent=19 // pred_check
          %p197 = pneg %p95
        $region26: #{tpu_custom_call.1} parent=19 // pred_check_branch
          %199 = sbr.rel (%p197) target = $region28
        $region27: #{tpu_custom_call.1} parent=19 // pred_region
          %p200 = scmp.lt.s32.totalorder %s21, 1
          %s201 = scalar_select %p200, %s21, 1
          %s202 = smul.addr %s201, 8
          %s203 = scalar_lea.vmem %s2, %s202
        $region28: #{tpu_custom_call.1} parent=19 // pred_fallthru
          _
        // Predicated region
        $region29: #{tpu_custom_call.1} parent=19 // pred_check
          %p204 = pneg %p123
        $region30: #{tpu_custom_call.1} parent=19 // pred_check_branch
          %206 = sbr.rel (%p204) target = $region32
        $region31: #{tpu_custom_call.1} parent=19 // pred_region
          %p207 = scmp.lt.s32.totalorder %s21, 1
          %s208 = scalar_select %p207, %s21, 1
          %p209 = scmp.lt.s32.totalorder %s22, 0
          %s210 = scalar_select %p209, %s22, 0
          %s211 = sadd.s32 %s210, %s208
          %s212 = scalar_lea.vmem %s3, %s211
        $region32: #{tpu_custom_call.1} parent=19 // pred_fallthru
          _
      $region20: #{tpu_custom_call.1} parent=5 // pred_fallthru
        _
      %p213 = scmp.le.s32.totalorder 1, %s14
      %p214 = scmp.lt.s32.totalorder %s14, 3
      %p215 = pnand %p213, %p214
      %p216 = pneg %p215
      // Predicated region
      $region33: #{tpu_custom_call.1} parent=5 // pred_check
        _
      $region34: #{tpu_custom_call.1} parent=5 // pred_check_branch
        %218 = sbr.rel (%p215) target = $region36
      $region35: #{tpu_custom_call.1} parent=5 // pred_region
        %s219 = ssub.s32 %s14, 1
        // Predicated region
        $region37: #{tpu_custom_call.1} parent=35 // pred_check
          %p220 = pneg %p47
        $region38: #{tpu_custom_call.1} parent=35 // pred_check_branch
          %222 = sbr.rel (%p220) target = $region40
        $region39: #{tpu_custom_call.1} parent=35 // pred_region
          %223 = dma.done [#allocation4], 16
        $region40: #{tpu_custom_call.1} parent=35 // pred_fallthru
          _
        %224 = sfence
        %p225 = pneg %p47
        %p226 = pneg %p44
        %p227 = scmp.lt.s32.totalorder %s23, 1
        %s228 = scalar_select %p227, %s23, 1
        %p229 = scmp.lt.s32.totalorder %s24, 0
        %s230 = scalar_select %p229, %s24, 0
        %s231 = sadd.s32 %s230, %s228
        %s232 = smul.addr %s231, 8
        %s233 = scalar_lea.vmem %s1, %s232
        %p234 = pneg %p75
        %p235 = pneg %p72
        %p236 = scmp.lt.s32.totalorder %s23, 1
        %s237 = scalar_select %p236, %s23, 1
        %s238 = smul.addr %s237, 8
        %s239 = scalar_lea.vmem %s2, %s238
        %p240 = pneg %p101
        %p241 = pneg %p98
        %p242 = scmp.lt.s32.totalorder %s23, 1
        %s243 = scalar_select %p242, %s23, 1
        %p244 = scmp.lt.s32.totalorder %s24, 0
        %s245 = scalar_select %p244, %s24, 0
        %s246 = sadd.s32 %s245, %s243
        %s247 = scalar_lea.vmem %s3, %s246
        %p248 = pneg %p129
        %p249 = pneg %p126
        %p250 = pneg %p157
        %p251 = pneg %p154
        %s252 = sand.u32 %s144, 1
        %s253 = scalar_lea.sflag [#allocation3], %s252
        %s254 = sand.u32 %s144, 1
        %s255 = scalar_lea.vmem [#allocation5], %s254
        %p256 = scmp.lt.s32.totalorder %s23, 1
        %s257 = scalar_select %p256, %s23, 1
        %p258 = scmp.lt.s32.totalorder %s24, 0
        %s259 = scalar_select %p258, %s24, 0
        %s260 = sadd.s32 %s259, %s257
        %s261 = smul.addr %s260, 8
        %s262 = scalar_lea.vmem %s1, %s261
        %p263 = scmp.lt.s32.totalorder %s23, 1
        %s264 = scalar_select %p263, %s23, 1
        %s265 = smul.addr %s264, 8
        %s266 = scalar_lea.vmem %s2, %s265
        %p267 = scmp.lt.s32.totalorder %s23, 1
        %s268 = scalar_select %p267, %s23, 1
        %p269 = scmp.lt.s32.totalorder %s24, 0
        %s270 = scalar_select %p269, %s24, 0
        %s271 = sadd.s32 %s270, %s268
        %s272 = scalar_lea.vmem %s3, %s271
        %s273 = sld [smem:[#allocation2]]
        %s274 = sld [smem:[#allocation2 + $0x1]]
        %s275 = sld [smem:[#allocation2 + $0x2]]
        %s276 = sld [smem:[#allocation2 + $0x3]]
        %s277 = sadd.f32 %s273, 1e-06
        %v278 = vstv %s277
        %v279 = vrcp.pop %v278
        %s280 = vtos %v279
        %s281 = sadd.f32 %s274, 1e-06
        %v282 = vstv %s281
        %v283 = vrcp.pop %v282
        %s284 = vtos %v283
        %v285 = vld [vmem:[%s272] sm:$0x1]
        %v286 = vstv %s280
        %v287 = vmul.f32 %v285, %v286
        %v288 = vstv %s275
        %v289 = vmul.f32 %v287, %v288
        %v290 = vstv %s276
        %v291 = vadd.f32 %v289, %v290
        %v292 = vmax.f32 %v291, 0.0
        %v293 = vld [vmem:[%s262] sm:$0xff]
        %v294 = vstv %s284
        %v295 = vmul.f32 %v293, %v294
        %v297 = vlaneseq
        %v298 = vshrl.u32 %v297, 7
        %v299 = vsub.s32 0, %v298
        %v300 = vrot.slane %v292, %v299
        %v302 = vadd.f32 %v295, %v300
        %v303 = vadd.f32 %v302, 1e-06
        %v304 = vrcp.pop %v303
        %v305 = vmul.f32 %v295, %v304
        %v306 = vld [vmem:[%s266] sm:$0xff]
        %308 = vset.pattern.permute.xlu0 0
        %309 = vperm.xlu0 %308, %v306
        %v310 = vpop.permute.xlu0 %309
        %v312 = vmul.f32 %v305, %v310
        %v313 = vrot.slane %v312, 4
        %v314 = vadd.f32 %v312, %v313
        %v315 = vrot.slane %v314, 2
        %v316 = vadd.f32 %v314, %v315
        %v317 = vrot.slane %v316, 1
        %v318 = vadd.f32 %v316, %v317
        %319 = vst [vmem:[%s255] sm:$0x1] %v318
        %s320 = sand.u32 %s144, 1
        %s321 = scalar_lea.sflag [#allocation3], %s320
        %s322 = sand.u32 %s144, 1
        %s323 = scalar_lea.vmem [#allocation5], %s322
        // Predicated region
        $region41: #{tpu_custom_call.1} parent=35 // pred_check
          %p324 = pneg %p154
        $region42: #{tpu_custom_call.1} parent=35 // pred_check_branch
          %326 = sbr.rel (%p324) target = $region44
        $region43: #{tpu_custom_call.1} parent=35 // pred_region
          %s328 = ssub.s32 16, 16
          %329 = vsyncadd %s321, %s328
          %s330 = sadd.s32 %s24, %s23
          %s331 = smul.addr %s330, 16
          %s332 = scalar_lea.hbm %s4, %s331
          %s334 = sshll.u32 %s323, 4
          %s335 = int_to_ptr.vmem [resolvable:$true] %s334
          %337 = dma.vmem_to_hbm [thread:$0]  %s335, 16, %s332, %s321
        $region44: #{tpu_custom_call.1} parent=35 // pred_fallthru
          _
      $region36: #{tpu_custom_call.1} parent=5 // pred_fallthru
        _
      %p338 = scmp.le.s32.totalorder 2, %s14
      // Predicated region
      $region45: #{tpu_custom_call.1} parent=5 // pred_check
        %p339 = pneg %p338
      $region46: #{tpu_custom_call.1} parent=5 // pred_check_branch
        %341 = sbr.rel (%p339) target = $region48
      $region47: #{tpu_custom_call.1} parent=5 // pred_region
        %s342 = ssub.s32 %s14, 2
        // Predicated region
        $region49: #{tpu_custom_call.1} parent=47 // pred_check
          %p343 = pneg %p160
        $region50: #{tpu_custom_call.1} parent=47 // pred_check_branch
          %345 = sbr.rel (%p343) target = $region52
        $region51: #{tpu_custom_call.1} parent=47 // pred_region
          %s346 = sand.u32 %s145, 1
          %s347 = scalar_lea.sflag [#allocation3], %s346
          %s348 = sand.u32 %s145, 1
          %s349 = scalar_lea.vmem [#allocation5], %s348
          %350 = dma.done %s347, 16
        $region52: #{tpu_custom_call.1} parent=47 // pred_fallthru
          _
      $region48: #{tpu_custom_call.1} parent=5 // pred_fallthru
        _
    $region6: #{tpu_custom_call.1} parent=1 // loop_footer
      %s18 = sadd.s32 1, %s14
    $region7: #{tpu_custom_call.1} parent=1 // loop_footer_branch
      %13 = sbr.rel target = $region3
    $region8: #{tpu_custom_call.1} parent=1 // loop_exit
      _
    %351 = vsyncpa [#allocation3], 1
    %s352 = scalar_lea.sflag [#allocation3], 1
    %353 = vsyncpa %s352, 1
    %354 = vsyncpa [#allocation4], 1
    %s355 = scalar_lea.sflag [#allocation4], 1
    %356 = vsyncpa %s355, 1

</llo_original>
